<compile_context>
chip_gen: v7x
topology: tpu7x:2x2x1
jax: 0.10.0
libtpu: 0.0.40
codegen_flags: <defaults>
</compile_context>

<pallas_src>
import functools

import jax
import jax.numpy as jnp
from jax import lax
from jax.experimental import pallas as pl
from jax.experimental.pallas import tpu as pltpu


# Conservative scoped-VMEM limit: above the 16 MiB v5e default, well inside
# v7x's 64 MiB per-TC physical VMEM.
VMEM_LIMIT = 32 * 1024 * 1024


# ------------------------------ small helpers --------------------------------

def _full_spec(shape):
    nd = len(shape)
    return pl.BlockSpec(shape, lambda *args, _nd=nd: (0,) * _nd)


def _row_tile(n):
    # Largest sublane-friendly row tile that evenly divides the token count.
    for t in (512, 256, 128, 64, 32, 16):
        if t <= n and n % t == 0:
            return t
    return n


def _sigmoid(x):
    # sigmoid(x) = 0.5*(tanh(0.5*x)+1): one EUP op instead of exp + reciprocal.
    return 0.5 * (jnp.tanh(0.5 * x) + 1.0)


# ----------------------------- Pallas kernels --------------------------------

def bert_adapter_kernel(e_ref, wenc_ref, benc_ref, wdn_ref, bdn_ref,
                        wup_ref, bup_ref, o_ref):
    # Synthetic stand-in for AdaptedBERT: one dense "encoder" layer followed by
    # the adapter bottleneck (down_project -> gelu -> up_project) + residual.
    # TODO(synk): the full pretrained multi-layer BERT encoder (and its use of
    # attention_mask) cannot be reproduced without a checkpoint.
    e = e_ref[...]                                                    # (TM, H) bf16
    h0 = jax.nn.gelu(
        jnp.dot(e, wenc_ref[...], preferred_element_type=jnp.float32)
        + benc_ref[...], approximate=True)                            # f32
    # NOTE: for production on v6e/v7x pad the bottleneck dim to a multiple of
    # 128 (numerically exact with zero-padded weights) for MXU efficiency.
    dn = jax.nn.gelu(
        jnp.dot(h0.astype(jnp.bfloat16), wdn_ref[...],
                preferred_element_type=jnp.float32) + bdn_ref[...],
        approximate=True)
    out = h0 + jnp.dot(dn.astype(jnp.bfloat16), wup_ref[...],
                       preferred_element_type=jnp.float32) + bup_ref[...]
    o_ref[...] = out.astype(o_ref.dtype)                              # bf16 store


def linear_kernel(x_ref, w_ref, b_ref, o_ref):
    # Row-tiled x @ W + b; bf16 MXU inputs, f32 accumulation, dtype of the
    # output ref decides the store precision (bf16 for intermediates).
    o_ref[...] = (jnp.dot(x_ref[...], w_ref[...],
                          preferred_element_type=jnp.float32)
                  + b_ref[...]).astype(o_ref.dtype)


def pooler_period_kernel(cls_ref, wp_ref, bp_ref, wc_ref, bc_ref, lbl_ref,
                         loss_ref):
    # Fused BERT pooler + period classifier + period loss (tiny; one launch).
    pooled = jnp.tanh(
        jnp.dot(cls_ref[...], wp_ref[...], preferred_element_type=jnp.float32)
        + bp_ref[...])                                                # (B, H)
    emb = jnp.mean(pooled, axis=0, keepdims=True)                     # (1, H)
    logits = jnp.dot(emb.astype(jnp.bfloat16), wc_ref[...],
                     preferred_element_type=jnp.float32) + bc_ref[...]
    m = jnp.max(logits, axis=-1, keepdims=True)
    ex = jnp.exp(logits - m)
    pred = ex / jnp.sum(ex, axis=-1, keepdims=True)
    loss_ref[...] = jnp.sum(-lbl_ref[...] * jnp.log(pred + 1e-15),
                            axis=-1, keepdims=True)


def bilstm_recurrence_kernel(xg_ref, whh_ref, out_ref,
                             hf_sc, cf_sc, hb_sc, cb_sc, *, seq, hd):
    # Both directions interleaved in one kernel body: two independent
    # dependence chains per timestep keep the MXU / EUP pipelines busier on
    # single-TC chips.  Input gates x@W_ih+b are precomputed (bf16); only the
    # recurrent h@W_hh matmul (bf16-in / f32-acc) lives in the time loop.
    # TODO(synk): for long sequences, chunk the time axis with manual
    # double-buffered DMA instead of keeping the whole xg block resident.
    hf_sc[...] = jnp.zeros_like(hf_sc)
    cf_sc[...] = jnp.zeros_like(cf_sc)
    hb_sc[...] = jnp.zeros_like(hb_sc)
    cb_sc[...] = jnp.zeros_like(cb_sc)

    whh = whh_ref[...]            # (2, hd, 4*hd) bf16, resident for all steps
    whh_f = whh[0]
    whh_b = whh[1]

    def cell(x_gates, h, c, whh_d):
        gates = x_gates.astype(jnp.float32) + jnp.dot(
            h.astype(jnp.bfloat16), whh_d, preferred_element_type=jnp.float32)
        # NOTE: with production hd a multiple of 128 these slices are
        # lane-aligned (no cross-lane relayouts).
        i = _sigmoid(gates[:, 0 * hd:1 * hd])
        f = _sigmoid(gates[:, 1 * hd:2 * hd])
        g = jnp.tanh(gates[:, 2 * hd:3 * hd])
        o = _sigmoid(gates[:, 3 * hd:4 * hd])
        c_new = f * c + i * g
        h_new = o * jnp.tanh(c_new)
        return h_new, c_new

    def step(t, carry):
        tf = t                    # forward time index
        tb = seq - 1 - t          # backward time index
        xf = xg_ref[tf]           # (B, 8*hd) bf16: [fwd gates | bwd gates]
        xb = xg_ref[tb]
        h_f, c_f = cell(xf[:, :4 * hd], hf_sc[...], cf_sc[...], whh_f)
        h_b, c_b = cell(xb[:, 4 * hd:], hb_sc[...], cb_sc[...], whh_b)
        hf_sc[...] = h_f
        cf_sc[...] = c_f
        hb_sc[...] = h_b
        cb_sc[...] = c_b
        # Direction selects the lane half of the (S, B, 2*hd) output directly;
        # no transpose / concat is needed between LSTM layers.
        out_ref[tf, :, 0:hd] = h_f.astype(out_ref.dtype)
        out_ref[tb, :, hd:2 * hd] = h_b.astype(out_ref.dtype)
        return carry

    # Partial unroll: keeps LLO scheduling visibility without vreg spills.
    lax.fori_loop(0, seq, step, 0, unroll=min(4, seq))


# ------------------------------ kernel wrappers -------------------------------

def run_bert_adapter(e_bf16, w_enc, b_enc, w_down, b_down, w_up, b_up):
    n, h = e_bf16.shape
    bt = w_down.shape[1]
    tm = _row_tile(n)
    return pl.pallas_call(
        bert_adapter_kernel,
        out_shape=jax.ShapeDtypeStruct((n, h), jnp.bfloat16),
        grid=(n // tm,),
        in_specs=[
            pl.BlockSpec((tm, h), lambda i: (i, 0)),
            pl.BlockSpec((h, h), lambda i: (0, 0)),
            pl.BlockSpec((1, h), lambda i: (0, 0)),
            pl.BlockSpec((h, bt), lambda i: (0, 0)),
            pl.BlockSpec((1, bt), lambda i: (0, 0)),
            pl.BlockSpec((bt, h), lambda i: (0, 0)),
            pl.BlockSpec((1, h), lambda i: (0, 0)),
        ],
        out_specs=pl.BlockSpec((tm, h), lambda i: (i, 0)),
        compiler_params=pltpu.CompilerParams(
            dimension_semantics=("parallel",),
            vmem_limit_bytes=VMEM_LIMIT),
    )(e_bf16, w_enc, b_enc, w_down, b_down, w_up, b_up)


def run_linear(x_bf16, w_bf16, b_f32, out_dtype):
    n, din = x_bf16.shape
    dout = w_bf16.shape[1]
    tm = _row_tile(n)
    return pl.pallas_call(
        linear_kernel,
        out_shape=jax.ShapeDtypeStruct((n, dout), out_dtype),
        grid=(n // tm,),
        in_specs=[pl.BlockSpec((tm, din), lambda i: (i, 0)),
                  pl.BlockSpec((din, dout), lambda i: (0, 0)),
                  pl.BlockSpec((1, dout), lambda i: (0, 0))],
        out_specs=pl.BlockSpec((tm, dout), lambda i: (i, 0)),
        compiler_params=pltpu.CompilerParams(
            dimension_semantics=("parallel",),
            vmem_limit_bytes=VMEM_LIMIT),
    )(x_bf16, w_bf16, b_f32)


def run_bilstm_recurrence(xg_bf16, w_hh_bf16):
    # xg: (S, B, 8*hd) precomputed input gates (bf16, both directions in lanes)
    # w_hh: (2, hd, 4*hd) bf16
    s, bsz, g8 = xg_bf16.shape
    hd = g8 // 8
    kernel = functools.partial(bilstm_recurrence_kernel, seq=s, hd=hd)
    return pl.pallas_call(
        kernel,
        out_shape=jax.ShapeDtypeStruct((s, bsz, 2 * hd), jnp.bfloat16),
        grid=(1,),
        in_specs=[_full_spec((s, bsz, g8)),
                  _full_spec((2, hd, 4 * hd))],
        out_specs=_full_spec((s, bsz, 2 * hd)),
        scratch_shapes=[pltpu.VMEM((bsz, hd), jnp.float32),
                        pltpu.VMEM((bsz, hd), jnp.float32),
                        pltpu.VMEM((bsz, hd), jnp.float32),
                        pltpu.VMEM((bsz, hd), jnp.float32)],
        compiler_params=pltpu.CompilerParams(
            dimension_semantics=("arbitrary",),
            vmem_limit_bytes=VMEM_LIMIT),
    )(xg_bf16, w_hh_bf16)


def run_bilstm(x_tm_bf16, lstm_layers, s, bsz):
    # x_tm_bf16: (S*B, F) bf16 in time-major order.  Matches PyTorch nn.LSTM
    # applied to the padded (unpacked) sequence, i.e. padded steps are processed.
    x = x_tm_bf16
    for layer in lstm_layers:
        g8 = layer['w_ih'].shape[1]
        hd = g8 // 8
        # One wide GEMM: both directions' input gates in one pass, bf16 out.
        xg = run_linear(x, layer['w_ih'].astype(jnp.bfloat16), layer['b'],
                        out_dtype=jnp.bfloat16)                  # (S*B, 8*hd)
        h = run_bilstm_recurrence(xg.reshape(s, bsz, g8),
                                  layer['w_hh'].astype(jnp.bfloat16))
        x = h.reshape(s * bsz, 2 * hd)                           # view, no transpose
    return x                                                     # (S*B, lstm_hidden) bf16


# -------------------------------- CRF (JAX) -----------------------------------
# TODO(synk): CRF dynamic-programming recurrence kept in plain JAX (tiny LxL
# per-step, control-heavy) rather than a Pallas kernel.

def _logsumexp(x, axis):
    m = jnp.max(x, axis=axis, keepdims=True)
    return jnp.squeeze(m, axis=axis) + jnp.log(jnp.sum(jnp.exp(x - m), axis=axis))


def crf_log_likelihood(emission, labels, mask, trans, start, end):
    # emission (B,S,L) f32, labels (B,S) int32, mask (B,S) f32 (mask[:,0]==1)
    em_t = jnp.transpose(emission, (1, 0, 2))     # (S, B, L)
    lab_t = jnp.transpose(labels)                 # (S, B)
    msk_t = jnp.transpose(mask)                   # (S, B)

    first_em = jnp.take_along_axis(em_t[0], lab_t[0][:, None], axis=-1)[:, 0]
    score0 = start[lab_t[0]] + first_em

    def num_step(carry, inp):
        score, prev_tag = carry
        em_i, lab_i, m_i = inp
        e = jnp.take_along_axis(em_i, lab_i[:, None], axis=-1)[:, 0]
        tr = trans[prev_tag, lab_i]
        score = score + m_i * (e + tr)
        prev_tag = jnp.where(m_i > 0, lab_i, prev_tag)
        return (score, prev_tag), None

    (score, last_tag), _ = lax.scan(
        num_step, (score0, lab_t[0]), (em_t[1:], lab_t[1:], msk_t[1:]))
    score = score + end[last_tag]

    alpha0 = start[None, :] + em_t[0]

    def den_step(alpha, inp):
        em_i, m_i = inp
        scores = alpha[:, :, None] + trans[None, :, :] + em_i[:, None, :]
        nxt = _logsumexp(scores, axis=1)
        alpha = jnp.where(m_i[:, None] > 0, nxt, alpha)
        return alpha, None

    alpha, _ = lax.scan(den_step, alpha0, (em_t[1:], msk_t[1:]))
    log_z = _logsumexp(alpha + end[None, :], axis=-1)
    return score - log_z


# -------------------------------- parameters ----------------------------------

def init_params(key, vocab, hidden, bottleneck, num_period, lstm_hidden,
                lstm_num_layers, num_labels, label_pad=128):
    hd = lstm_hidden // 2
    keys = iter(jax.random.split(key, 64))

    def nrm(shape, scale=0.1):
        return scale * jax.random.normal(next(keys), shape, jnp.float32)

    w_lin = nrm((lstm_hidden, num_labels))
    p = {
        'emb': nrm((vocab, hidden)),
        'w_enc': nrm((hidden, hidden)), 'b_enc': jnp.zeros((1, hidden), jnp.float32),
        'w_down': nrm((hidden, bottleneck)), 'b_down': jnp.zeros((1, bottleneck), jnp.float32),
        'w_up': nrm((bottleneck, hidden)), 'b_up': jnp.zeros((1, hidden), jnp.float32),
        'w_pool': nrm((hidden, hidden)), 'b_pool': jnp.zeros((1, hidden), jnp.float32),
        'w_period': nrm((hidden, num_period)), 'b_period': jnp.zeros((1, num_period), jnp.float32),
        # Emission head stored lane-dense: num_labels zero-padded to label_pad
        # so the Pallas store path never emits masked partial stores.
        'w_lin_pad': jnp.zeros((lstm_hidden, label_pad),
                               jnp.float32).at[:, :num_labels].set(w_lin),
        'b_lin_pad': jnp.zeros((1, label_pad), jnp.float32),
        'crf_trans': nrm((num_labels, num_labels)),
        'crf_start': nrm((num_labels,)),
        'crf_end': nrm((num_labels,)),
    }
    layers = []
    in_size = hidden
    for _ in range(lstm_num_layers):
        layers.append({
            # W_ih of both directions concatenated along the output dim:
            # lanes [0:4*hd] = forward gates, [4*hd:8*hd] = backward gates.
            # 'b' is the combined PyTorch bias (b_ih + b_hh) of both directions.
            'w_ih': nrm((in_size, 8 * hd)),
            'w_hh': nrm((2, hd, 4 * hd)),
            'b': jnp.zeros((1, 8 * hd), jnp.float32),
        })
        in_size = lstm_hidden
    p['lstm'] = layers
    return p


# ---------------------------------- forward -----------------------------------

def ner_learner_forward(params, input_ids, attention_mask,
                        ner_labels=None, period_label=None):
    b, s = input_ids.shape
    h = params['emb'].shape[1]
    n = b * s
    num_labels = params['crf_trans'].shape[0]

    # Tokens are kept time-major (S, B) up to the emission head so the BiLSTM
    # needs no transposes.
    ids_tm = jnp.transpose(input_ids)                                # (S, B)
    e = params['emb'][ids_tm].reshape(n, h)                          # gather (XLA)

    # AdaptedBERT stand-in: row-tiled encoder + adapter kernel (embs[0]), bf16 out.
    seq_flat = run_bert_adapter(
        e.astype(jnp.bfloat16),
        params['w_enc'].astype(jnp.bfloat16), params['b_enc'],
        params['w_down'].astype(jnp.bfloat16), params['b_down'],
        params['w_up'].astype(jnp.bfloat16), params['b_up'])         # (S*B, H) bf16

    period_loss = None
    if period_label is not None:
        cls = seq_flat[:b]                    # time step 0 of every batch row
        p_dim = params['w_period'].shape[1]
        lbl = period_label.astype(jnp.float32).reshape(1, p_dim)
        loss = pl.pallas_call(
            pooler_period_kernel,
            out_shape=jax.ShapeDtypeStruct((1, 1), jnp.float32),
            grid=(1,),
            in_specs=[_full_spec((b, h)), _full_spec((h, h)), _full_spec((1, h)),
                      _full_spec((h, p_dim)), _full_spec((1, p_dim)),
                      _full_spec((1, p_dim))],
            out_specs=_full_spec((1, 1)),
            compiler_params=pltpu.CompilerParams(
                vmem_limit_bytes=VMEM_LIMIT),
        )(cls, params['w_pool'].astype(jnp.bfloat16), params['b_pool'],
          params['w_period'].astype(jnp.bfloat16), params['b_period'], lbl)
        period_loss = loss[0, 0]

    # BiLSTM (lstm_batch_first=True path), time-major internally, bf16 activations.
    lstm_flat = run_bilstm(seq_flat, params['lstm'], s, b)           # (S*B, 2*hd) bf16

    # Emission head: lane-dense padded output, sliced back to num_labels.
    lbl_pad = params['w_lin_pad'].shape[1]
    em_pad = run_linear(lstm_flat,
                        params['w_lin_pad'].astype(jnp.bfloat16),
                        params['b_lin_pad'],
                        out_dtype=jnp.float32)                       # (S*B, 128) f32
    emission = jnp.transpose(em_pad.reshape(s, b, lbl_pad),
                             (1, 0, 2))[:, :, :num_labels]           # (B, S, L)

    opt = (emission,)
    if ner_labels is not None:
        llh = crf_log_likelihood(emission, ner_labels,
                                 attention_mask.astype(jnp.float32),
                                 params['crf_trans'], params['crf_start'],
                                 params['crf_end'])
        opt = opt + (-jnp.mean(llh),)
    if period_label is not None:
        opt = opt + (period_loss,)
    return opt


if __name__ == "__main__":
    B, S = 2, 8
    VOCAB, HIDDEN, BOTTLENECK = 50, 32, 8
    NUM_PERIOD, LSTM_HIDDEN, LSTM_LAYERS, NUM_LABELS = 4, 32, 1, 5

    key = jax.random.PRNGKey(0)
    pkey, ikey, lkey = jax.random.split(key, 3)
    params = init_params(pkey, VOCAB, HIDDEN, BOTTLENECK, NUM_PERIOD,
                         LSTM_HIDDEN, LSTM_LAYERS, NUM_LABELS)

    input_ids = jax.random.randint(ikey, (B, S), 0, VOCAB, dtype=jnp.int32)
    attention_mask = jnp.ones((B, S), jnp.int32).at[1, 6:].set(0)
    ner_labels = jax.random.randint(lkey, (B, S), 0, NUM_LABELS, dtype=jnp.int32)
    period_label = jax.nn.one_hot(jnp.array(1), NUM_PERIOD)

    emission, ner_loss, period_loss = ner_learner_forward(
        params, input_ids, attention_mask, ner_labels, period_label)
    jax.block_until_ready((emission, ner_loss, period_loss))

    assert emission.shape == (B, S, NUM_LABELS)
    assert ner_loss.shape == () and period_loss.shape == ()
    assert bool(jnp.isfinite(ner_loss)) and bool(jnp.isfinite(period_loss))
    print("KERNEL_OK")
</pallas_src>

<mosaic_0001>
module attributes {stable_mosaic.version = 11 : i64} {
  func.func @bert_adapter_kernel(%arg0: i32, %arg1: memref<16x32xbf16, #tpu.memory_space<vmem>>, %arg2: memref<32x32xbf16, #tpu.memory_space<vmem>>, %arg3: memref<1x32xf32, #tpu.memory_space<vmem>>, %arg4: memref<32x8xbf16, #tpu.memory_space<vmem>>, %arg5: memref<1x8xf32, #tpu.memory_space<vmem>>, %arg6: memref<8x32xbf16, #tpu.memory_space<vmem>>, %arg7: memref<1x32xf32, #tpu.memory_space<vmem>>, %arg8: memref<16x32xbf16, #tpu.memory_space<vmem>>) attributes {dimension_semantics = [#tpu.dimension_semantics<parallel>], iteration_bounds = array<i64: 1>, scalar_prefetch = 0 : i64, scratch_operands = 0 : i64, tpu.core_type = #tpu.core_type<tc>, window_params = [{transform_indices = @transform_0, window_bounds = array<i64: 16, 32>}, {pipeline_mode = #tpu.pipeline_mode<synchronous>, transform_indices = @transform_1, window_bounds = array<i64: 32, 32>}, {pipeline_mode = #tpu.pipeline_mode<synchronous>, transform_indices = @transform_2, window_bounds = array<i64: 1, 32>}, {pipeline_mode = #tpu.pipeline_mode<synchronous>, transform_indices = @transform_3, window_bounds = array<i64: 32, 8>}, {pipeline_mode = #tpu.pipeline_mode<synchronous>, transform_indices = @transform_4, window_bounds = array<i64: 1, 8>}, {pipeline_mode = #tpu.pipeline_mode<synchronous>, transform_indices = @transform_5, window_bounds = array<i64: 8, 32>}, {pipeline_mode = #tpu.pipeline_mode<synchronous>, transform_indices = @transform_6, window_bounds = array<i64: 1, 32>}, {transform_indices = @transform_7, window_bounds = array<i64: 16, 32>}]} {
    %c0 = arith.constant 0 : index
    %c0_0 = arith.constant 0 : index
    %0 = vector.load %arg1[%c0, %c0_0] : memref<16x32xbf16, #tpu.memory_space<vmem>>, vector<16x32xbf16>
    %c0_1 = arith.constant 0 : index
    %c0_2 = arith.constant 0 : index
    %1 = vector.load %arg2[%c0_1, %c0_2] : memref<32x32xbf16, #tpu.memory_space<vmem>>, vector<32x32xbf16>
    %cst = arith.constant dense<0.000000e+00> : vector<16x32xf32>
    %2 = tpu.matmul %0, %1, %cst {dimension_numbers = #tpu.dot_dimension_numbers<[1], [0], [0], [1], [0, 0, 1, 1], [], []>} : vector<16x32xbf16>, vector<32x32xbf16>, vector<16x32xf32> -> vector<16x32xf32>
    %c0_3 = arith.constant 0 : index
    %c0_4 = arith.constant 0 : index
    %3 = vector.load %arg3[%c0_3, %c0_4] : memref<1x32xf32, #tpu.memory_space<vmem>>, vector<1x32xf32>
    %4 = vector.broadcast %3 : vector<1x32xf32> to vector<16x32xf32>
    %5 = arith.addf %2, %4 : vector<16x32xf32>
    %6 = arith.mulf %5, %5 : vector<16x32xf32>
    %7 = arith.mulf %5, %6 : vector<16x32xf32>
    %cst_5 = arith.constant 4.471500e-02 : f32
    %8 = vector.broadcast %cst_5 : f32 to vector<16x32xf32>
    %9 = arith.mulf %8, %7 : vector<16x32xf32>
    %10 = arith.addf %5, %9 : vector<16x32xf32>
    %cst_6 = arith.constant 0.797884583 : f32
    %11 = vector.broadcast %cst_6 : f32 to vector<16x32xf32>
    %12 = arith.mulf %11, %10 : vector<16x32xf32>
    %13 = math.tanh %12 : vector<16x32xf32>
    %cst_7 = arith.constant 1.000000e+00 : f32
    %14 = vector.broadcast %cst_7 : f32 to vector<16x32xf32>
    %15 = arith.addf %14, %13 : vector<16x32xf32>
    %cst_8 = arith.constant 5.000000e-01 : f32
    %16 = vector.broadcast %cst_8 : f32 to vector<16x32xf32>
    %17 = arith.mulf %16, %15 : vector<16x32xf32>
    %18 = arith.mulf %5, %17 : vector<16x32xf32>
    %19 = arith.truncf %18 : vector<16x32xf32> to vector<16x32xbf16>
    %c0_9 = arith.constant 0 : index
    %c0_10 = arith.constant 0 : index
    %20 = vector.load %arg4[%c0_9, %c0_10] : memref<32x8xbf16, #tpu.memory_space<vmem>>, vector<32x8xbf16>
    %cst_11 = arith.constant dense<0.000000e+00> : vector<16x8xf32>
    %21 = tpu.matmul %19, %20, %cst_11 {dimension_numbers = #tpu.dot_dimension_numbers<[1], [0], [0], [1], [0, 0, 1, 1], [], []>} : vector<16x32xbf16>, vector<32x8xbf16>, vector<16x8xf32> -> vector<16x8xf32>
    %c0_12 = arith.constant 0 : index
    %c0_13 = arith.constant 0 : index
    %22 = vector.load %arg5[%c0_12, %c0_13] : memref<1x8xf32, #tpu.memory_space<vmem>>, vector<1x8xf32>
    %23 = vector.broadcast %22 : vector<1x8xf32> to vector<16x8xf32>
    %24 = arith.addf %21, %23 : vector<16x8xf32>
    %25 = arith.mulf %24, %24 : vector<16x8xf32>
    %26 = arith.mulf %24, %25 : vector<16x8xf32>
    %cst_14 = arith.constant 4.471500e-02 : f32
    %27 = vector.broadcast %cst_14 : f32 to vector<16x8xf32>
    %28 = arith.mulf %27, %26 : vector<16x8xf32>
    %29 = arith.addf %24, %28 : vector<16x8xf32>
    %cst_15 = arith.constant 0.797884583 : f32
    %30 = vector.broadcast %cst_15 : f32 to vector<16x8xf32>
    %31 = arith.mulf %30, %29 : vector<16x8xf32>
    %32 = math.tanh %31 : vector<16x8xf32>
    %cst_16 = arith.constant 1.000000e+00 : f32
    %33 = vector.broadcast %cst_16 : f32 to vector<16x8xf32>
    %34 = arith.addf %33, %32 : vector<16x8xf32>
    %cst_17 = arith.constant 5.000000e-01 : f32
    %35 = vector.broadcast %cst_17 : f32 to vector<16x8xf32>
    %36 = arith.mulf %35, %34 : vector<16x8xf32>
    %37 = arith.mulf %24, %36 : vector<16x8xf32>
    %38 = arith.truncf %37 : vector<16x8xf32> to vector<16x8xbf16>
    %c0_18 = arith.constant 0 : index
    %c0_19 = arith.constant 0 : index
    %39 = vector.load %arg6[%c0_18, %c0_19] : memref<8x32xbf16, #tpu.memory_space<vmem>>, vector<8x32xbf16>
    %cst_20 = arith.constant dense<0.000000e+00> : vector<16x32xf32>
    %40 = tpu.matmul %38, %39, %cst_20 {dimension_numbers = #tpu.dot_dimension_numbers<[1], [0], [0], [1], [0, 0, 1, 1], [], []>} : vector<16x8xbf16>, vector<8x32xbf16>, vector<16x32xf32> -> vector<16x32xf32>
    %41 = arith.addf %18, %40 : vector<16x32xf32>
    %c0_21 = arith.constant 0 : index
    %c0_22 = arith.constant 0 : index
    %42 = vector.load %arg7[%c0_21, %c0_22] : memref<1x32xf32, #tpu.memory_space<vmem>>, vector<1x32xf32>
    %43 = vector.broadcast %42 : vector<1x32xf32> to vector<16x32xf32>
    %44 = arith.addf %41, %43 : vector<16x32xf32>
    %45 = arith.truncf %44 : vector<16x32xf32> to vector<16x32xbf16>
    %c0_23 = arith.constant 0 : index
    %c0_24 = arith.constant 0 : index
    %46 = vector.load %arg8[%c0_23, %c0_24] : memref<16x32xbf16, #tpu.memory_space<vmem>>, vector<16x32xbf16>
    tpu.vector_store %arg8[%c0_23, %c0_24], %45 {strides = array<i32>} : memref<16x32xbf16, #tpu.memory_space<vmem>>, vector<16x32xbf16>,
    return
  }
  func.func @transform_0(%arg0: i32) -> (i32, i32) {
    %c0_i32 = arith.constant 0 : i32
    %c0_i32_0 = arith.constant 0 : i32
    return %arg0, %c0_i32 : i32, i32
  }
  func.func @transform_1(%arg0: i32) -> (i32, i32) {
    %c0_i32 = arith.constant 0 : i32
    %c0_i32_0 = arith.constant 0 : i32
    %c0_i32_1 = arith.constant 0 : i32
    return %c0_i32, %c0_i32_0 : i32, i32
  }
  func.func @transform_2(%arg0: i32) -> (i32, i32) {
    %c0_i32 = arith.constant 0 : i32
    %c0_i32_0 = arith.constant 0 : i32
    %c0_i32_1 = arith.constant 0 : i32
    return %c0_i32, %c0_i32_0 : i32, i32
  }
  func.func @transform_3(%arg0: i32) -> (i32, i32) {
    %c0_i32 = arith.constant 0 : i32
    %c0_i32_0 = arith.constant 0 : i32
    %c0_i32_1 = arith.constant 0 : i32
    return %c0_i32, %c0_i32_0 : i32, i32
  }
  func.func @transform_4(%arg0: i32) -> (i32, i32) {
    %c0_i32 = arith.constant 0 : i32
    %c0_i32_0 = arith.constant 0 : i32
    %c0_i32_1 = arith.constant 0 : i32
    return %c0_i32, %c0_i32_0 : i32, i32
  }
  func.func @transform_5(%arg0: i32) -> (i32, i32) {
    %c0_i32 = arith.constant 0 : i32
    %c0_i32_0 = arith.constant 0 : i32
    %c0_i32_1 = arith.constant 0 : i32
    return %c0_i32, %c0_i32_0 : i32, i32
  }
  func.func @transform_6(%arg0: i32) -> (i32, i32) {
    %c0_i32 = arith.constant 0 : i32
    %c0_i32_0 = arith.constant 0 : i32
    %c0_i32_1 = arith.constant 0 : i32
    return %c0_i32, %c0_i32_0 : i32, i32
  }
  func.func @transform_7(%arg0: i32) -> (i32, i32) {
    %c0_i32 = arith.constant 0 : i32
    %c0_i32_0 = arith.constant 0 : i32
    return %arg0, %c0_i32 : i32, i32
  }
}

</mosaic_0001>

<llo_original>
// kernel: tpu_custom_call.1
$region0: #{tpu_custom_call.1}
  #allocation0 [shape = 'u32[]', space=smem, size = 0x4, offset = 0x4, fixed_abs, tag = 'smem constant byte address 0x4 - core index']
  #allocation1 [shape = 'u32[144,128]{1,0:T(1,128)}', space=vmem, size = 0x12000, scoped, tag = 'internal scratch']
  %s0 = inlined_call_operand.hbm [shape: bf16[16,32], index: 0, kind: input, shape index: {}]
  %s1 = inlined_call_operand.vmem [shape: bf16[32,32], index: 1, kind: input, shape index: {}]
  %s2 = inlined_call_operand.vmem [shape: f32[1,32], index: 2, kind: input, shape index: {}]
  %s3 = inlined_call_operand.vmem [shape: bf16[32,8], index: 3, kind: input, shape index: {}]
  %s4 = inlined_call_operand.vmem [shape: f32[1,8], index: 4, kind: input, shape index: {}]
  %s5 = inlined_call_operand.vmem [shape: bf16[8,32], index: 5, kind: input, shape index: {}]
  %s6 = inlined_call_operand.vmem [shape: f32[1,32], index: 6, kind: input, shape index: {}]
  %s7 = inlined_call_operand.hbm [shape: bf16[16,32], index: 7, kind: output, shape index: {}]
  %s8 = sld [smem:[#allocation0]]
  $region42: #{tpu_custom_call.1} parent=0
    _
  %s10 = ssub.s32 1, %s8
  %s11 = scalar_select 0, %s10, %s8
  $region1: #{tpu_custom_call.1} parent=0
    #allocation2 [shape = 'u8[4096]{0}', space=vmem, size = 0x1000, scoped, tag = 'input window, operand 0, single buffered']
    #allocation3 [shape = 's32[1]{0}', space=sflag, size = 0x4, scoped, tag = 'scoped memory for tpu_custom_call.1']
    #allocation4 [shape = 's32[1]{0}', space=sflag, size = 0x4, scoped, tag = 'scoped memory for tpu_custom_call.1']
    #allocation5 [shape = 'u8[4096]{0}', space=vmem, size = 0x1000, scoped, tag = 'output window, operand 0, single buffered']
    %12 = vsyncpa [#allocation3], 0
    %13 = vsyncpa [#allocation4], 0
    // Predicated region
    $region2: #{tpu_custom_call.1} parent=1 // pred_check
      _
    $region3: #{tpu_custom_call.1} parent=1 // pred_check_branch
      %15 = sbr.rel (0) target = $region5
    $region4: #{tpu_custom_call.1} parent=1 // pred_region
      %s17 = ssub.s32 128, 128
      %18 = vsyncadd [#allocation3], %s17
      %s19 = sshll.u32 [#allocation2], 4
      %s20 = int_to_ptr.vmem [resolvable:$true] %s19
      %25 = dma.hbm_to_vmem [thread:$0]  %s0, 128, %s20, [#allocation3], 64, 64, 4
    $region5: #{tpu_custom_call.1} parent=1 // pred_fallthru
      _
    // Predicated region
    $region6: #{tpu_custom_call.1} parent=1 // pred_check
      _
    $region7: #{tpu_custom_call.1} parent=1 // pred_check_branch
      %27 = sbr.rel (0) target = $region9
    $region8: #{tpu_custom_call.1} parent=1 // pred_region
      _
    $region9: #{tpu_custom_call.1} parent=1 // pred_fallthru
      _
    // Predicated region
    $region10: #{tpu_custom_call.1} parent=1 // pred_check
      _
    $region11: #{tpu_custom_call.1} parent=1 // pred_check_branch
      %29 = sbr.rel (0) target = $region13
    $region12: #{tpu_custom_call.1} parent=1 // pred_region
      _
    $region13: #{tpu_custom_call.1} parent=1 // pred_fallthru
      _
    // Predicated region
    $region14: #{tpu_custom_call.1} parent=1 // pred_check
      _
    $region15: #{tpu_custom_call.1} parent=1 // pred_check_branch
      %31 = sbr.rel (0) target = $region17
    $region16: #{tpu_custom_call.1} parent=1 // pred_region
      _
    $region17: #{tpu_custom_call.1} parent=1 // pred_fallthru
      _
    // Predicated region
    $region18: #{tpu_custom_call.1} parent=1 // pred_check
      _
    $region19: #{tpu_custom_call.1} parent=1 // pred_check_branch
      %33 = sbr.rel (0) target = $region21
    $region20: #{tpu_custom_call.1} parent=1 // pred_region
      _
    $region21: #{tpu_custom_call.1} parent=1 // pred_fallthru
      _
    // Predicated region
    $region22: #{tpu_custom_call.1} parent=1 // pred_check
      _
    $region23: #{tpu_custom_call.1} parent=1 // pred_check_branch
      %35 = sbr.rel (0) target = $region25
    $region24: #{tpu_custom_call.1} parent=1 // pred_region
      _
    $region25: #{tpu_custom_call.1} parent=1 // pred_fallthru
      _
    // Predicated region
    $region26: #{tpu_custom_call.1} parent=1 // pred_check
      _
    $region27: #{tpu_custom_call.1} parent=1 // pred_check_branch
      %37 = sbr.rel (0) target = $region29
    $region28: #{tpu_custom_call.1} parent=1 // pred_region
      _
    $region29: #{tpu_custom_call.1} parent=1 // pred_fallthru
      _
    // Predicated region
    $region30: #{tpu_custom_call.1} parent=1 // pred_check
      _
    $region31: #{tpu_custom_call.1} parent=1 // pred_check_branch
      %39 = sbr.rel (0) target = $region33
    $region32: #{tpu_custom_call.1} parent=1 // pred_region
      %40 = dma.done [#allocation3], 128
    $region33: #{tpu_custom_call.1} parent=1 // pred_fallthru
      _
    %v42 = vld [vmem:[#allocation2] sm:$0xf]
    %v43 = vld [vmem:[#allocation2 + $0x4] sm:$0xf]
    %v44 = vld [vmem:[%s1] sm:$0xf]
    %v45 = vld [vmem:[%s1 + $0x4] sm:$0xf]
    %v46 = vld [vmem:[%s1 + $0x8] sm:$0xf]
    %v47 = vld [vmem:[%s1 + $0xc] sm:$0xf]
    %v48 = vld [vmem:[%s2] sm:$0x1]
    %v50 = vlaneseq
    %v51 = vshrl.u32 %v50, 7
    %v52 = vsub.s32 0, %v51
    %v53 = vrot.slane %v48, %v52
    %v57 = vunpack.c.l.b16 %v42
    %v58 = vunpack.c.l.b16 %v43
    %v59 = vpack.c.b16 %v58, %v57
    %v64 = vunpack.c.l.b16 %v44
    %v65 = vunpack.c.l.b16 %v45
    %v66 = vunpack.c.l.b16 %v46
    %v67 = vunpack.c.l.b16 %v47
    %v68 = vpack.c.b16 %v65, %v64
    %v69 = vpack.c.b16 %v67, %v66
    %vm72 = vcmask 261120
    %v74 = vsel %vm72, %v59, 0
    %76 = vmatprep.subr.bf16.mxu0 0
    %77 = vmatpush1.bf16.msra.mxu0 %v68
    %78 = vmatprep.subr.bf16.mxu0 0
    %79 = vmatpush1.bf16.msra.mxu0 %v69
    %80 = vmatprep.subr.bf16.mxu0 0
    %81 = vmatpush1.bf16.msra.mxu0 0
    %82 = vmatprep.subr.bf16.mxu0 0
    %83 = vmatpush1.bf16.msra.mxu0 0
    %84 = vmatprep.subr.bf16.mxu0 0
    %85 = vmatpush1.bf16.msra.mxu0 0
    %86 = vmatprep.subr.bf16.mxu0 0
    %87 = vmatpush1.bf16.msra.mxu0 0
    %88 = vmatprep.subr.bf16.mxu0 0
    %89 = vmatpush1.bf16.msra.mxu0 0
    %90 = vmatprep.subr.bf16.mxu0 0
    %91 = vmatpush1.bf16.msra.mxu0 0
    %92 = vmatprep.subr.bf16.mxu0 0
    %93 = vmatpush1.bf16.msra.mxu0 0
    %94 = vmatprep.subr.bf16.mxu0 0
    %95 = vmatpush1.bf16.msra.mxu0 0
    %96 = vmatprep.subr.bf16.mxu0 0
    %97 = vmatpush1.bf16.msra.mxu0 0
    %98 = vmatprep.subr.bf16.mxu0 0
    %99 = vmatpush1.bf16.msra.mxu0 0
    %100 = vmatprep.subr.bf16.mxu0 0
    %101 = vmatpush1.bf16.msra.mxu0 0
    %102 = vmatprep.subr.bf16.mxu0 0
    %103 = vmatpush1.bf16.msra.mxu0 0
    %104 = vmatprep.subr.bf16.mxu0 0
    %105 = vmatpush1.bf16.msra.mxu0 0
    %106 = vmatprep.subr.bf16.mxu0 0
    %107 = vmatpush1.bf16.msra.mxu0 0
    %108 = vmatprep.mubr.bf16.mxu0 0
    %109 = vmatmul.mubr.bf16.gmra.mrb[0].mxu0 %v74
    %v110 = vpop.f32.mrb[0].mxu0
    %v111 = vadd.f32 %v53, %v110
    %v112 = vpop.f32.mrb[0].mxu0
    %v113 = vpop.f32.mrb[0].mxu0
    %v114 = vadd.f32 %v53, %v113
    %v115 = vpop.f32.mrb[0].mxu0
    %116 = vdwg.mxu0
    %v117 = vmul.f32 %v111, %v111
    %v118 = vmul.f32 %v114, %v114
    %v119 = vmul.f32 %v111, %v117
    %v120 = vmul.f32 %v114, %v118
    %v121 = vmul.f32 %v119, 0.044715
    %v122 = vmul.f32 %v120, 0.044715
    %v123 = vadd.f32 %v111, %v121
    %v124 = vadd.f32 %v114, %v122
    %v125 = vmul.f32 %v123, 0.7978846
    %v126 = vmul.f32 %v124, 0.7978846
    %v127 = vtanh.pop %v125
    %v128 = vtanh.pop %v126
    %v129 = vadd.f32 %v127, 1.0
    %v130 = vadd.f32 %v128, 1.0
    %v131 = vmul.f32 %v129, 0.5
    %v132 = vmul.f32 %v130, 0.5
    %v133 = vmul.f32 %v111, %v131
    %v134 = vmul.f32 %v114, %v132
    %v135 = vpack.c.bf16 %v134, %v133
    %v136 = vld [vmem:[%s3] sm:$0xf]
    %v137 = vld [vmem:[%s3 + $0x4] sm:$0xf]
    %v138 = vld [vmem:[%s3 + $0x8] sm:$0xf]
    %v139 = vld [vmem:[%s3 + $0xc] sm:$0xf]
    %v140 = vld [vmem:[%s4] sm:$0x1]
    %v142 = vlaneseq
    %v143 = vshrl.u32 %v142, 7
    %v144 = vsub.s32 0, %v143
    %v145 = vrot.slane %v140, %v144
    %v151 = vunpack.c.l.b16 %v136
    %v152 = vunpack.c.l.b16 %v137
    %v153 = vunpack.c.l.b16 %v138
    %v154 = vunpack.c.l.b16 %v139
    %v155 = vpack.c.b16 %v152, %v151
    %v156 = vpack.c.b16 %v154, %v153
    %v160 = vsel %vm72, %v135, 0
    %162 = vmatprep.subr.bf16.mxu0 0
    %163 = vmatpush1.bf16.msra.mxu0 %v155
    %164 = vmatprep.subr.bf16.mxu0 0
    %165 = vmatpush1.bf16.msra.mxu0 %v156
    %166 = vmatprep.subr.bf16.mxu0 0
    %167 = vmatpush1.bf16.msra.mxu0 0
    %168 = vmatprep.subr.bf16.mxu0 0
    %169 = vmatpush1.bf16.msra.mxu0 0
    %170 = vmatprep.subr.bf16.mxu0 0
    %171 = vmatpush1.bf16.msra.mxu0 0
    %172 = vmatprep.subr.bf16.mxu0 0
    %173 = vmatpush1.bf16.msra.mxu0 0
    %174 = vmatprep.subr.bf16.mxu0 0
    %175 = vmatpush1.bf16.msra.mxu0 0
    %176 = vmatprep.subr.bf16.mxu0 0
    %177 = vmatpush1.bf16.msra.mxu0 0
    %178 = vmatprep.subr.bf16.mxu0 0
    %179 = vmatpush1.bf16.msra.mxu0 0
    %180 = vmatprep.subr.bf16.mxu0 0
    %181 = vmatpush1.bf16.msra.mxu0 0
    %182 = vmatprep.subr.bf16.mxu0 0
    %183 = vmatpush1.bf16.msra.mxu0 0
    %184 = vmatprep.subr.bf16.mxu0 0
    %185 = vmatpush1.bf16.msra.mxu0 0
    %186 = vmatprep.subr.bf16.mxu0 0
    %187 = vmatpush1.bf16.msra.mxu0 0
    %188 = vmatprep.subr.bf16.mxu0 0
    %189 = vmatpush1.bf16.msra.mxu0 0
    %190 = vmatprep.subr.bf16.mxu0 0
    %191 = vmatpush1.bf16.msra.mxu0 0
    %192 = vmatprep.subr.bf16.mxu0 0
    %193 = vmatpush1.bf16.msra.mxu0 0
    %194 = vmatprep.mubr.bf16.mxu0 0
    %195 = vmatmul.mubr.bf16.gmra.mrb[0].mxu0 %v160
    %v196 = vpop.f32.mrb[0].mxu0
    %v197 = vadd.f32 %v145, %v196
    %v198 = vpop.f32.mrb[0].mxu0
    %v199 = vpop.f32.mrb[0].mxu0
    %v200 = vadd.f32 %v145, %v199
    %v201 = vpop.f32.mrb[0].mxu0
    %202 = vdwg.mxu0
    %v203 = vmul.f32 %v197, %v197
    %v204 = vmul.f32 %v200, %v200
    %v205 = vmul.f32 %v197, %v203
    %v206 = vmul.f32 %v200, %v204
    %v207 = vmul.f32 %v205, 0.044715
    %v208 = vmul.f32 %v206, 0.044715
    %v209 = vadd.f32 %v197, %v207
    %v210 = vadd.f32 %v200, %v208
    %v211 = vmul.f32 %v209, 0.7978846
    %v212 = vmul.f32 %v210, 0.7978846
    %v213 = vtanh.pop %v211
    %v214 = vtanh.pop %v212
    %v215 = vadd.f32 %v213, 1.0
    %v216 = vadd.f32 %v214, 1.0
    %v217 = vmul.f32 %v215, 0.5
    %v218 = vmul.f32 %v216, 0.5
    %v219 = vmul.f32 %v197, %v217
    %v220 = vmul.f32 %v200, %v218
    %v221 = vpack.c.bf16 %v220, %v219
    %v222 = vld [vmem:[%s5] sm:$0xf]
    %vm223 = vcmask 64512
    %v225 = vsel %vm223, %v221, 0
    %vm227 = vcmask 1043456
    %v229 = vsel %vm227, %v222, 0
    %231 = vmatprep.subr.bf16.mxu0 0
    %232 = vmatpush1.bf16.msra.mxu0 %v229
    %233 = vmatprep.subr.bf16.mxu0 0
    %234 = vmatpush1.bf16.msra.mxu0 0
    %235 = vmatprep.subr.bf16.mxu0 0
    %236 = vmatpush1.bf16.msra.mxu0 0
    %237 = vmatprep.subr.bf16.mxu0 0
    %238 = vmatpush1.bf16.msra.mxu0 0
    %239 = vmatprep.subr.bf16.mxu0 0
    %240 = vmatpush1.bf16.msra.mxu0 0
    %241 = vmatprep.subr.bf16.mxu0 0
    %242 = vmatpush1.bf16.msra.mxu0 0
    %243 = vmatprep.subr.bf16.mxu0 0
    %244 = vmatpush1.bf16.msra.mxu0 0
    %245 = vmatprep.subr.bf16.mxu0 0
    %246 = vmatpush1.bf16.msra.mxu0 0
    %247 = vmatprep.subr.bf16.mxu0 0
    %248 = vmatpush1.bf16.msra.mxu0 0
    %249 = vmatprep.subr.bf16.mxu0 0
    %250 = vmatpush1.bf16.msra.mxu0 0
    %251 = vmatprep.subr.bf16.mxu0 0
    %252 = vmatpush1.bf16.msra.mxu0 0
    %253 = vmatprep.subr.bf16.mxu0 0
    %254 = vmatpush1.bf16.msra.mxu0 0
    %255 = vmatprep.subr.bf16.mxu0 0
    %256 = vmatpush1.bf16.msra.mxu0 0
    %257 = vmatprep.subr.bf16.mxu0 0
    %258 = vmatpush1.bf16.msra.mxu0 0
    %259 = vmatprep.subr.bf16.mxu0 0
    %260 = vmatpush1.bf16.msra.mxu0 0
    %261 = vmatprep.subr.bf16.mxu0 0
    %262 = vmatpush1.bf16.msra.mxu0 0
    %263 = vmatprep.mubr.bf16.mxu0 0
    %264 = vmatmul.mubr.bf16.gmra.mrb[0].mxu0 %v225
    %v265 = vpop.f32.mrb[0].mxu0
    %v266 = vadd.f32 0.0, %v265
    %v267 = vpop.f32.mrb[0].mxu0
    %v268 = vpop.f32.mrb[0].mxu0
    %v269 = vadd.f32 0.0, %v268
    %v270 = vpop.f32.mrb[0].mxu0
    %271 = vdwg.mxu0
    %v272 = vadd.f32 %v133, %v266
    %v273 = vadd.f32 %v134, %v269
    %v274 = vld [vmem:[%s6] sm:$0x1]
    %v276 = vlaneseq
    %v277 = vshrl.u32 %v276, 7
    %v278 = vsub.s32 0, %v277
    %v279 = vrot.slane %v274, %v278
    %v281 = vadd.f32 %v272, %v279
    %v282 = vadd.f32 %v273, %v279
    %v283 = vpack.c.bf16 %v282, %v281
    %v285 = vunpack.c.l.b16 %v283
    %v286 = vunpack.c.h.b16 %v283
    %v287 = vpack.c.b16 %v285, %v285
    %v288 = vpack.c.b16 %v286, %v286
    %vm291 = vcmask 257024
    %292 = vst.msk [vmem:[#allocation5] sm:$0xf] %vm291, %v287
    %293 = vst.msk [vmem:[#allocation5 + $0x4] sm:$0xf] %vm291, %v288
    // Predicated region
    $region34: #{tpu_custom_call.1} parent=1 // pred_check
      _
    $region35: #{tpu_custom_call.1} parent=1 // pred_check_branch
      %295 = sbr.rel (0) target = $region37
    $region36: #{tpu_custom_call.1} parent=1 // pred_region
      %s297 = ssub.s32 128, 128
      %298 = vsyncadd [#allocation4], %s297
      %s299 = sshll.u32 [#allocation5], 4
      %s300 = int_to_ptr.vmem [resolvable:$true] %s299
      %305 = dma.vmem_to_hbm [thread:$0]  %s300, 128, %s7, [#allocation4], 64, 64, 4
    $region37: #{tpu_custom_call.1} parent=1 // pred_fallthru
      _
    // Predicated region
    $region38: #{tpu_custom_call.1} parent=1 // pred_check
      _
    $region39: #{tpu_custom_call.1} parent=1 // pred_check_branch
      %307 = sbr.rel (0) target = $region41
    $region40: #{tpu_custom_call.1} parent=1 // pred_region
      %308 = dma.done [#allocation4], 128
    $region41: #{tpu_custom_call.1} parent=1 // pred_fallthru
      _
    %309 = vsyncpa [#allocation3], 1
    %310 = vsyncpa [#allocation4], 1

</llo_original>
